<compile_context>
chip_gen: v6e
topology: v6e:2x2x1
jax: 0.10.0
libtpu: 0.0.40
codegen_flags: <defaults>
</compile_context>

<pallas_src>
import functools

import jax
import jax.numpy as jnp
from jax import lax
from jax.experimental import pallas as pl
from jax.experimental.pallas import tpu as pltpu


def _round_up(a, b):
    return (a + b - 1) // b * b


def student_rbf_kernel(x_ref, cp2_ref, cps_ref, srow_ref, lw_ref, lb_ref, out_ref):
    x = x_ref[...]          # (TILE_N, F)  batch tile, features on lanes
    cp2 = cp2_ref[...]      # (C, F)   = (2*gamma/F) * projected centroids
    cps = cps_ref[...]      # (C, 1)   = -(gamma/F) * |projected centroid|^2
    srow = srow_ref[...]    # (1, F)   filled with -(gamma/F)

    # arg[c, n] = -gamma * mse[n, c], with N on the 128-lane axis:
    #   +2*gamma/F * <cp_c, x_n>   -> (C, TILE_N)  MXU matmul, no transposes
    #   -(gamma/F) * |x_n|^2       -> (1, TILE_N)  tiny MXU matmul (lane-dense)
    #   -(gamma/F) * |cp_c|^2      -> (C, 1)       broadcast
    dn = (((1,), (1,)), ((), ()))  # contract the F axes of both operands
    cross = lax.dot_general(cp2, x, dn, preferred_element_type=jnp.float32)
    xsq = lax.dot_general(srow, x * x, dn, preferred_element_type=jnp.float32)
    arg = cross + xsq + cps                      # (C, TILE_N)

    # Clamp mse >= 0 (i.e. arg <= 0) to match (diff**2).mean() semantics.
    rbf = jnp.exp(jnp.minimum(arg, 0.0))         # (C, TILE_N)

    # Head: (1, C) @ (C, TILE_N) + b as C scalar-weighted VPU adds (MXU-free).
    num_clusters = rbf.shape[0]
    acc = lw_ref[0] * rbf[0:1, :]
    for c in range(1, num_clusters):
        acc = acc + lw_ref[c] * rbf[c:c + 1, :]
    out_ref[...] = acc + lb_ref[0]               # lane-dense (1, TILE_N) store


def student_rbf_forward(x, centroids, proj_w, proj_b, lin_w, lin_b, gamma, *,
                        tile_n=4096):
    n, f = x.shape
    c, _d = centroids.shape

    # ---- grid-invariant preprocessing, hoisted out of the kernel (XLA fuses it)
    scale = -float(gamma) / float(f)                               # -gamma / F
    cp = (centroids @ proj_w.T + proj_b[None, :]).astype(jnp.float32)   # (C, F)
    cp2 = (-2.0 * scale) * cp                                      # (C, F)
    cps = scale * jnp.sum(cp * cp, axis=1, keepdims=True)          # (C, 1)
    srow = jnp.full((1, f), scale, dtype=jnp.float32)              # (1, F)
    lw = lin_w.reshape(c).astype(jnp.float32)                      # (C,)  -> SMEM
    lb = lin_b.reshape(1).astype(jnp.float32)                      # (1,)  -> SMEM

    # ---- batch tiling
    if n <= tile_n:
        tile = _round_up(n, 8)                 # single block, sublane-aligned
    else:
        if tile_n % 128 != 0:
            raise ValueError("tile_n must be a multiple of 128 when tiling N")
        tile = tile_n
    n_pad = _round_up(n, tile)
    num_tiles = n_pad // tile
    x_pad = x.astype(jnp.float32)
    if n_pad != n:
        x_pad = jnp.pad(x_pad, ((0, n_pad - n), (0, 0)))

    out = pl.pallas_call(
        student_rbf_kernel,
        out_shape=jax.ShapeDtypeStruct((1, n_pad), jnp.float32),
        grid=(num_tiles,),
        in_specs=[
            pl.BlockSpec((tile, f), lambda i: (i, 0)),            # x tile (pipelined)
            pl.BlockSpec((c, f), lambda i: (0, 0)),               # cp2 (resident)
            pl.BlockSpec((c, 1), lambda i: (0, 0)),               # cps (resident)
            pl.BlockSpec((1, f), lambda i: (0, 0)),               # srow (resident)
            pl.BlockSpec(memory_space=pltpu.MemorySpace.SMEM),    # head weights
            pl.BlockSpec(memory_space=pltpu.MemorySpace.SMEM),    # head bias
        ],
        out_specs=pl.BlockSpec((1, tile), lambda i: (0, i)),      # lane-dense slab
        compiler_params=pltpu.CompilerParams(
            dimension_semantics=("parallel",)),
    )(x_pad, cp2, cps, srow, lw, lb)

    return out[0, :n].reshape(n, 1)


def reference_forward(x, centroids, proj_w, proj_b, lin_w, lin_b, gamma):
    cp = centroids @ proj_w.T + proj_b[None, :]                # (C, F)
    diff = x[:, None, :] - cp[None, :, :]                      # (N, C, F)
    mse = jnp.mean(diff ** 2, axis=2)                          # (N, C)
    rbf = jnp.exp(-gamma * mse)                                # (N, C)
    return rbf @ lin_w.T + lin_b[None, :]                      # (N, 1)


if __name__ == "__main__":
    # Shapes consistent with the module:
    #   N = batch, F = input_features (scaled raw sensor features),
    #   D = centroid_dim = F + 10 (raw features + 10 detector scores),
    #   C = n_clusters = 3
    N, F, C = 200, 16, 3
    D = F + 10
    gamma = 4.7665163962213235

    key = jax.random.PRNGKey(0)
    k_x, k_cent, k_pw, k_pb, k_lw, k_lb = jax.random.split(key, 6)

    x = jax.random.uniform(k_x, (N, F), dtype=jnp.float32)          # min-max scaled ~ [0,1]
    centroids = jax.random.uniform(k_cent, (C, D), dtype=jnp.float32)
    # nn.Linear(centroid_dim, input_features): weight (F, D), bias (F,)
    proj_w = jax.random.normal(k_pw, (F, D), dtype=jnp.float32) * 0.1
    proj_b = jax.random.normal(k_pb, (F,), dtype=jnp.float32) * 0.1
    # nn.Linear(n_clusters, 1): weight (1, C), bias (1,)
    lin_w = jax.random.normal(k_lw, (1, C), dtype=jnp.float32) * 0.1
    lin_b = jax.random.normal(k_lb, (1,), dtype=jnp.float32) * 0.1

    ref = reference_forward(x, centroids, proj_w, proj_b, lin_w, lin_b, gamma)

    # Single-block path (whole batch fits one tile).
    out1 = jax.block_until_ready(
        student_rbf_forward(x, centroids, proj_w, proj_b, lin_w, lin_b, gamma))
    # Gridded / pipelined path (two 128-row tiles, exercises padding + grid).
    out2 = jax.block_until_ready(
        student_rbf_forward(x, centroids, proj_w, proj_b, lin_w, lin_b, gamma,
                            tile_n=128))

    assert out1.shape == (N, 1) and out2.shape == (N, 1)
    assert jnp.allclose(out1, ref, atol=1e-5, rtol=1e-4), "mismatch vs reference (single tile)"
    assert jnp.allclose(out2, ref, atol=1e-5, rtol=1e-4), "mismatch vs reference (gridded)"

    print("KERNEL_OK")
</pallas_src>

<mosaic_0001>
module attributes {stable_mosaic.version = 11 : i64} {
  func.func @student_rbf_kernel(%arg0: i32, %arg1: memref<200x16xf32, #tpu.memory_space<vmem>>, %arg2: memref<3x16xf32, #tpu.memory_space<vmem>>, %arg3: memref<3x1xf32, #tpu.memory_space<vmem>>, %arg4: memref<1x16xf32, #tpu.memory_space<vmem>>, %arg5: memref<3xf32, #tpu.memory_space<smem>>, %arg6: memref<1xf32, #tpu.memory_space<smem>>, %arg7: memref<1x200xf32, #tpu.memory_space<vmem>>) attributes {dimension_semantics = [#tpu.dimension_semantics<parallel>], iteration_bounds = array<i64: 1>, scalar_prefetch = 0 : i64, scratch_operands = 0 : i64, tpu.core_type = #tpu.core_type<tc>, window_params = [{transform_indices = @transform_0, window_bounds = array<i64: 200, 16>}, {pipeline_mode = #tpu.pipeline_mode<synchronous>, transform_indices = @transform_1, window_bounds = array<i64: 3, 16>}, {pipeline_mode = #tpu.pipeline_mode<synchronous>, transform_indices = @transform_2, window_bounds = array<i64: 3, 1>}, {pipeline_mode = #tpu.pipeline_mode<synchronous>, transform_indices = @transform_3, window_bounds = array<i64: 1, 16>}, {transform_indices = @transform_4, window_bounds = array<i64: 3>}, {transform_indices = @transform_5, window_bounds = array<i64: 1>}, {transform_indices = @transform_6, window_bounds = array<i64: 1, 200>}]} {
    %c0 = arith.constant 0 : index
    %c0_0 = arith.constant 0 : index
    %0 = vector.load %arg1[%c0, %c0_0] : memref<200x16xf32, #tpu.memory_space<vmem>>, vector<200x16xf32>
    %c0_1 = arith.constant 0 : index
    %c0_2 = arith.constant 0 : index
    %1 = vector.load %arg2[%c0_1, %c0_2] : memref<3x16xf32, #tpu.memory_space<vmem>>, vector<3x16xf32>
    %c0_3 = arith.constant 0 : index
    %c0_4 = arith.constant 0 : index
    %2 = vector.load %arg3[%c0_3, %c0_4] : memref<3x1xf32, #tpu.memory_space<vmem>>, vector<3x1xf32>
    %c0_5 = arith.constant 0 : index
    %c0_6 = arith.constant 0 : index
    %3 = vector.load %arg4[%c0_5, %c0_6] : memref<1x16xf32, #tpu.memory_space<vmem>>, vector<1x16xf32>
    %cst = arith.constant dense<0.000000e+00> : vector<3x200xf32>
    %4 = tpu.matmul %1, %0, %cst {dimension_numbers = #tpu.dot_dimension_numbers<[1], [1], [0], [0], [0, 0, 1, 0], [], []>} : vector<3x16xf32>, vector<200x16xf32>, vector<3x200xf32> -> vector<3x200xf32>
    %5 = arith.mulf %0, %0 : vector<200x16xf32>
    %cst_7 = arith.constant dense<0.000000e+00> : vector<1x200xf32>
    %6 = tpu.matmul %3, %5, %cst_7 {dimension_numbers = #tpu.dot_dimension_numbers<[1], [1], [0], [0], [0, 0, 1, 0], [], []>} : vector<1x16xf32>, vector<200x16xf32>, vector<1x200xf32> -> vector<1x200xf32>
    %7 = vector.broadcast %6 : vector<1x200xf32> to vector<3x200xf32>
    %8 = arith.addf %4, %7 : vector<3x200xf32>
    %9 = vector.broadcast %2 : vector<3x1xf32> to vector<3x200xf32>
    %10 = arith.addf %8, %9 : vector<3x200xf32>
    %cst_8 = arith.constant 0.000000e+00 : f32
    %11 = vector.broadcast %cst_8 : f32 to vector<3x200xf32>
    %12 = arith.minimumf %10, %11 : vector<3x200xf32>
    %13 = math.exp %12 : vector<3x200xf32>
    %c0_9 = arith.constant 0 : index
    %14 = memref.load %arg5[%c0_9] : memref<3xf32, #tpu.memory_space<smem>>
    %15 = vector.extract_strided_slice %13 {offsets = [0, 0], sizes = [1, 200], strides = [1, 1]} : vector<3x200xf32> to vector<1x200xf32>
    %16 = vector.broadcast %14 : f32 to vector<1x200xf32>
    %17 = arith.mulf %16, %15 : vector<1x200xf32>
    %c1 = arith.constant 1 : index
    %18 = memref.load %arg5[%c1] : memref<3xf32, #tpu.memory_space<smem>>
    %19 = vector.extract_strided_slice %13 {offsets = [1, 0], sizes = [1, 200], strides = [1, 1]} : vector<3x200xf32> to vector<1x200xf32>
    %20 = vector.broadcast %18 : f32 to vector<1x200xf32>
    %21 = arith.mulf %20, %19 : vector<1x200xf32>
    %22 = arith.addf %17, %21 : vector<1x200xf32>
    %c2 = arith.constant 2 : index
    %23 = memref.load %arg5[%c2] : memref<3xf32, #tpu.memory_space<smem>>
    %24 = vector.extract_strided_slice %13 {offsets = [2, 0], sizes = [1, 200], strides = [1, 1]} : vector<3x200xf32> to vector<1x200xf32>
    %25 = vector.broadcast %23 : f32 to vector<1x200xf32>
    %26 = arith.mulf %25, %24 : vector<1x200xf32>
    %27 = arith.addf %22, %26 : vector<1x200xf32>
    %c0_10 = arith.constant 0 : index
    %28 = memref.load %arg6[%c0_10] : memref<1xf32, #tpu.memory_space<smem>>
    %29 = vector.broadcast %28 : f32 to vector<1x200xf32>
    %30 = arith.addf %27, %29 : vector<1x200xf32>
    %c0_11 = arith.constant 0 : index
    %c0_12 = arith.constant 0 : index
    %31 = vector.load %arg7[%c0_11, %c0_12] : memref<1x200xf32, #tpu.memory_space<vmem>>, vector<1x200xf32>
    tpu.vector_store %arg7[%c0_11, %c0_12], %30 {strides = array<i32>} : memref<1x200xf32, #tpu.memory_space<vmem>>, vector<1x200xf32>,
    return
  }
  func.func @transform_0(%arg0: i32) -> (i32, i32) {
    %c0_i32 = arith.constant 0 : i32
    %c0_i32_0 = arith.constant 0 : i32
    return %arg0, %c0_i32 : i32, i32
  }
  func.func @transform_1(%arg0: i32) -> (i32, i32) {
    %c0_i32 = arith.constant 0 : i32
    %c0_i32_0 = arith.constant 0 : i32
    %c0_i32_1 = arith.constant 0 : i32
    return %c0_i32, %c0_i32_0 : i32, i32
  }
  func.func @transform_2(%arg0: i32) -> (i32, i32) {
    %c0_i32 = arith.constant 0 : i32
    %c0_i32_0 = arith.constant 0 : i32
    %c0_i32_1 = arith.constant 0 : i32
    return %c0_i32, %c0_i32_0 : i32, i32
  }
  func.func @transform_3(%arg0: i32) -> (i32, i32) {
    %c0_i32 = arith.constant 0 : i32
    %c0_i32_0 = arith.constant 0 : i32
    %c0_i32_1 = arith.constant 0 : i32
    return %c0_i32, %c0_i32_0 : i32, i32
  }
  func.func @transform_4(%arg0: i32) -> i32 {
    %c0_i32 = arith.constant 0 : i32
    %c0_i32_0 = arith.constant 0 : i32
    return %c0_i32 : i32
  }
  func.func @transform_5(%arg0: i32) -> i32 {
    %c0_i32 = arith.constant 0 : i32
    %c0_i32_0 = arith.constant 0 : i32
    return %c0_i32 : i32
  }
  func.func @transform_6(%arg0: i32) -> (i32, i32) {
    %c0_i32 = arith.constant 0 : i32
    %c0_i32_0 = arith.constant 0 : i32
    return %c0_i32, %arg0 : i32, i32
  }
}

</mosaic_0001>

<llo_original>
// kernel: tpu_custom_call.1
$region0: #{tpu_custom_call.1}
  #allocation0 [shape = 'u32[]', space=smem, size = 0x4, offset = 0x4, fixed_abs, tag = 'smem constant byte address 0x4 - core index']
  #allocation1 [shape = 'u32[144,128]{1,0:T(1,128)}', space=vmem, size = 0x12000, scoped, tag = 'internal scratch']
  #allocation2 [shape = 'f32[1]{0:T(128)S(6)}', space=smem, size = 0x200, scoped, tag = 'scoped memory for tpu_custom_call.1']
  %s0 = inlined_call_operand.vmem [shape: f32[200,16], index: 0, kind: input, shape index: {}]
  %s1 = inlined_call_operand.vmem [shape: f32[3,16], index: 1, kind: input, shape index: {}]
  %s2 = inlined_call_operand.vmem [shape: f32[3,1], index: 2, kind: input, shape index: {}]
  %s3 = inlined_call_operand.vmem [shape: f32[1,16], index: 3, kind: input, shape index: {}]
  %s4 = inlined_call_operand.vmem [shape: f32[3], index: 4, kind: input, shape index: {}]
  %s5 = inlined_call_operand.<no memory space> [shape: f32[1], index: 5, kind: input, shape index: {}]
  %s6 = inlined_call_operand.hbm [shape: f32[1,200], index: 6, kind: output, shape index: {}]
  %s7 = sld [smem:[#allocation0]]
  $region38: #{tpu_custom_call.1} parent=0
    _
  %s9 = ssub.s32 1, %s7
  %s10 = scalar_select 0, %s9, %s7
  %11 = sst [smem:[#allocation2]] %s5
  $region1: #{tpu_custom_call.1} parent=0
    #allocation3 [shape = 'u8[512]{0}', space=smem, size = 0x200, scoped, tag = 'input window, operand 4, single buffered']
    #allocation4 [shape = 's32[1]{0}', space=sflag, size = 0x4, scoped, tag = 'scoped memory for tpu_custom_call.1']
    #allocation5 [shape = 's32[1]{0}', space=sflag, size = 0x4, scoped, tag = 'scoped memory for tpu_custom_call.1']
    #allocation6 [shape = 'u8[1024]{0}', space=vmem, size = 0x400, scoped, tag = 'output window, operand 0, single buffered']
    %12 = vsyncpa [#allocation5], 0
    %13 = vsyncpa [#allocation4], 0
    // Predicated region
    $region2: #{tpu_custom_call.1} parent=1 // pred_check
      _
    $region3: #{tpu_custom_call.1} parent=1 // pred_check_branch
      %15 = sbr.rel (0) target = $region5
    $region4: #{tpu_custom_call.1} parent=1 // pred_region
      _
    $region5: #{tpu_custom_call.1} parent=1 // pred_fallthru
      _
    // Predicated region
    $region6: #{tpu_custom_call.1} parent=1 // pred_check
      _
    $region7: #{tpu_custom_call.1} parent=1 // pred_check_branch
      %17 = sbr.rel (0) target = $region9
    $region8: #{tpu_custom_call.1} parent=1 // pred_region
      _
    $region9: #{tpu_custom_call.1} parent=1 // pred_fallthru
      _
    // Predicated region
    $region10: #{tpu_custom_call.1} parent=1 // pred_check
      _
    $region11: #{tpu_custom_call.1} parent=1 // pred_check_branch
      %19 = sbr.rel (0) target = $region13
    $region12: #{tpu_custom_call.1} parent=1 // pred_region
      _
    $region13: #{tpu_custom_call.1} parent=1 // pred_fallthru
      _
    // Predicated region
    $region14: #{tpu_custom_call.1} parent=1 // pred_check
      _
    $region15: #{tpu_custom_call.1} parent=1 // pred_check_branch
      %21 = sbr.rel (0) target = $region17
    $region16: #{tpu_custom_call.1} parent=1 // pred_region
      _
    $region17: #{tpu_custom_call.1} parent=1 // pred_fallthru
      _
    // Predicated region
    $region18: #{tpu_custom_call.1} parent=1 // pred_check
      _
    $region19: #{tpu_custom_call.1} parent=1 // pred_check_branch
      %23 = sbr.rel (0) target = $region21
    $region20: #{tpu_custom_call.1} parent=1 // pred_region
      %s25 = ssub.s32 16, 16
      %26 = vsyncadd [#allocation5], %s25
      %s28 = sshll.u32 %s4, 4
      %s29 = int_to_ptr.vmem [resolvable:$true] %s28
      %31 = dma.vmem_to_smem %s29, 16, [#allocation3], [#allocation5]
    $region21: #{tpu_custom_call.1} parent=1 // pred_fallthru
      _
    // Predicated region
    $region22: #{tpu_custom_call.1} parent=1 // pred_check
      _
    $region23: #{tpu_custom_call.1} parent=1 // pred_check_branch
      %33 = sbr.rel (0) target = $region25
    $region24: #{tpu_custom_call.1} parent=1 // pred_region
      _
    $region25: #{tpu_custom_call.1} parent=1 // pred_fallthru
      _
    // Predicated region
    $region26: #{tpu_custom_call.1} parent=1 // pred_check
      _
    $region27: #{tpu_custom_call.1} parent=1 // pred_check_branch
      %35 = sbr.rel (0) target = $region29
    $region28: #{tpu_custom_call.1} parent=1 // pred_region
      %36 = dma.done [#allocation5], 16
    $region29: #{tpu_custom_call.1} parent=1 // pred_fallthru
      _
    %37 = sfence
    %v38 = vld [vmem:[%s0] sm:$0xff]
    %v39 = vld [vmem:[%s0 + $0x8] sm:$0xff]
    %v40 = vld [vmem:[%s0 + $0x10] sm:$0xff]
    %v41 = vld [vmem:[%s0 + $0x18] sm:$0xff]
    %v42 = vld [vmem:[%s0 + $0x20] sm:$0xff]
    %v43 = vld [vmem:[%s0 + $0x28] sm:$0xff]
    %v44 = vld [vmem:[%s0 + $0x30] sm:$0xff]
    %v45 = vld [vmem:[%s0 + $0x38] sm:$0xff]
    %v46 = vld [vmem:[%s0 + $0x40] sm:$0xff]
    %v47 = vld [vmem:[%s0 + $0x48] sm:$0xff]
    %v48 = vld [vmem:[%s0 + $0x50] sm:$0xff]
    %v49 = vld [vmem:[%s0 + $0x58] sm:$0xff]
    %v50 = vld [vmem:[%s0 + $0x60] sm:$0xff]
    %v51 = vld [vmem:[%s0 + $0x68] sm:$0xff]
    %v52 = vld [vmem:[%s0 + $0x70] sm:$0xff]
    %v53 = vld [vmem:[%s0 + $0x78] sm:$0xff]
    %v54 = vld [vmem:[%s0 + $0x80] sm:$0xff]
    %v55 = vld [vmem:[%s0 + $0x88] sm:$0xff]
    %v56 = vld [vmem:[%s0 + $0x90] sm:$0xff]
    %v57 = vld [vmem:[%s0 + $0x98] sm:$0xff]
    %v58 = vld [vmem:[%s0 + $0xa0] sm:$0xff]
    %v59 = vld [vmem:[%s0 + $0xa8] sm:$0xff]
    %v60 = vld [vmem:[%s0 + $0xb0] sm:$0xff]
    %v61 = vld [vmem:[%s0 + $0xb8] sm:$0xff]
    %v62 = vld [vmem:[%s0 + $0xc0] sm:$0xff]
    %v63 = vld [vmem:[%s1] sm:$0x7]
    %v64 = vld [vmem:[%s2] sm:$0x7]
    %v65 = vld [vmem:[%s3] sm:$0x1]
    %v66 = vmul.f32 %v38, %v38
    %v67 = vmul.f32 %v39, %v39
    %v68 = vmul.f32 %v40, %v40
    %v69 = vmul.f32 %v41, %v41
    %v70 = vmul.f32 %v42, %v42
    %v71 = vmul.f32 %v43, %v43
    %v72 = vmul.f32 %v44, %v44
    %v73 = vmul.f32 %v45, %v45
    %v74 = vmul.f32 %v46, %v46
    %v75 = vmul.f32 %v47, %v47
    %v76 = vmul.f32 %v48, %v48
    %v77 = vmul.f32 %v49, %v49
    %v78 = vmul.f32 %v50, %v50
    %v79 = vmul.f32 %v51, %v51
    %v80 = vmul.f32 %v52, %v52
    %v81 = vmul.f32 %v53, %v53
    %v82 = vmul.f32 %v54, %v54
    %v83 = vmul.f32 %v55, %v55
    %v84 = vmul.f32 %v56, %v56
    %v85 = vmul.f32 %v57, %v57
    %v86 = vmul.f32 %v58, %v58
    %v87 = vmul.f32 %v59, %v59
    %v88 = vmul.f32 %v60, %v60
    %v89 = vmul.f32 %v61, %v61
    %v90 = vmul.f32 %v62, %v62
    %vm91 = vcmask 130048
    %v93 = vsel %vm91, %v65, 0
    %v96 = vsel %vm91, %v66, 0
    %v99 = vsel %vm91, %v67, 0
    %v102 = vsel %vm91, %v68, 0
    %v105 = vsel %vm91, %v69, 0
    %v108 = vsel %vm91, %v70, 0
    %v111 = vsel %vm91, %v71, 0
    %v114 = vsel %vm91, %v72, 0
    %v117 = vsel %vm91, %v73, 0
    %v120 = vsel %vm91, %v74, 0
    %v123 = vsel %vm91, %v75, 0
    %v126 = vsel %vm91, %v76, 0
    %v129 = vsel %vm91, %v77, 0
    %v132 = vsel %vm91, %v78, 0
    %v135 = vsel %vm91, %v79, 0
    %v138 = vsel %vm91, %v80, 0
    %v141 = vsel %vm91, %v81, 0
    %v144 = vsel %vm91, %v82, 0
    %v147 = vsel %vm91, %v83, 0
    %v150 = vsel %vm91, %v84, 0
    %v153 = vsel %vm91, %v85, 0
    %v156 = vsel %vm91, %v86, 0
    %v159 = vsel %vm91, %v87, 0
    %v162 = vsel %vm91, %v88, 0
    %v165 = vsel %vm91, %v89, 0
    %v168 = vsel %vm91, %v90, 0
    %170 = vmatprep.subr.mxu0 0.0
    %171 = vmatpush1.xpose.msra.mxu0 %v141
    %172 = vmatprep.subr.mxu0 0.0
    %173 = vmatpush1.xpose.msra.mxu0 %v138
    %174 = vmatprep.subr.mxu0 0.0
    %175 = vmatpush1.xpose.msra.mxu0 %v135
    %176 = vmatprep.subr.mxu0 0.0
    %177 = vmatpush1.xpose.msra.mxu0 %v132
    %178 = vmatprep.subr.mxu0 0.0
    %179 = vmatpush1.xpose.msra.mxu0 %v129
    %180 = vmatprep.subr.mxu0 0.0
    %181 = vmatpush1.xpose.msra.mxu0 %v126
    %182 = vmatprep.subr.mxu0 0.0
    %183 = vmatpush1.xpose.msra.mxu0 %v123
    %184 = vmatprep.subr.mxu0 0.0
    %185 = vmatpush1.xpose.msra.mxu0 %v120
    %186 = vmatprep.subr.mxu0 0.0
    %187 = vmatpush1.xpose.msra.mxu0 %v117
    %188 = vmatprep.subr.mxu0 0.0
    %189 = vmatpush1.xpose.msra.mxu0 %v114
    %190 = vmatprep.subr.mxu0 0.0
    %191 = vmatpush1.xpose.msra.mxu0 %v111
    %192 = vmatprep.subr.mxu0 0.0
    %193 = vmatpush1.xpose.msra.mxu0 %v108
    %194 = vmatprep.subr.mxu0 0.0
    %195 = vmatpush1.xpose.msra.mxu0 %v105
    %196 = vmatprep.subr.mxu0 0.0
    %197 = vmatpush1.xpose.msra.mxu0 %v102
    %198 = vmatprep.subr.mxu0 0.0
    %199 = vmatpush1.xpose.msra.mxu0 %v99
    %200 = vmatprep.subr.mxu0 0.0
    %201 = vmatpush1.xpose.msra.mxu0 %v96
    %202 = vmatprep.subr.mxu0 0.0
    %203 = vmatpush2.xpose.msra.mxu0 0.0
    %204 = vmatprep.subr.mxu0 0.0
    %205 = vmatpush2.xpose.msra.mxu0 0.0
    %206 = vmatprep.subr.mxu0 0.0
    %207 = vmatpush2.xpose.msra.mxu0 0.0
    %208 = vmatprep.subr.mxu0 0.0
    %209 = vmatpush2.xpose.msra.mxu0 0.0
    %210 = vmatprep.subr.mxu0 0.0
    %211 = vmatpush2.xpose.msra.mxu0 0.0
    %212 = vmatprep.subr.mxu0 0.0
    %213 = vmatpush2.xpose.msra.mxu0 0.0
    %214 = vmatprep.subr.mxu0 0.0
    %215 = vmatpush2.xpose.msra.mxu0 0.0
    %216 = vmatprep.subr.mxu0 0.0
    %217 = vmatpush2.xpose.msra.mxu0 %v168
    %218 = vmatprep.subr.mxu0 0.0
    %219 = vmatpush2.xpose.msra.mxu0 %v165
    %220 = vmatprep.subr.mxu0 0.0
    %221 = vmatpush2.xpose.msra.mxu0 %v162
    %222 = vmatprep.subr.mxu0 0.0
    %223 = vmatpush2.xpose.msra.mxu0 %v159
    %224 = vmatprep.subr.mxu0 0.0
    %225 = vmatpush2.xpose.msra.mxu0 %v156
    %226 = vmatprep.subr.mxu0 0.0
    %227 = vmatpush2.xpose.msra.mxu0 %v153
    %228 = vmatprep.subr.mxu0 0.0
    %229 = vmatpush2.xpose.msra.mxu0 %v150
    %230 = vmatprep.subr.mxu0 0.0
    %231 = vmatpush2.xpose.msra.mxu0 %v147
    %232 = vmatprep.subr.mxu0 0.0
    %233 = vmatpush2.xpose.msra.mxu0 %v144
    %234 = vmatprep.mubr.f32.mxu0 0.0
    %235 = vmatmul.mubr.f32.gmra.mxu0 %v93
    %v236 = vpop.f32.mrf.mxu0
    %v237 = vadd.f32 0.0, %v236
    %v238 = vpop.f32.mrf.mxu0
    %v239 = vadd.f32 0.0, %v238
    %240 = vdwg.mxu0
    %v241 = vlaneseq
    %v242 = vshrl.u32 %v241, 7
    %v243 = vsub.s32 0, %v242
    %v244 = vrot.slane %v237, %v243
    %v245 = vlaneseq
    %v246 = vshrl.u32 %v245, 7
    %v247 = vsub.s32 0, %v246
    %v248 = vrot.slane %v239, %v247
    %v250 = vsel %vm91, %v63, 0
    %v253 = vsel %vm91, %v38, 0
    %v256 = vsel %vm91, %v39, 0
    %v259 = vsel %vm91, %v40, 0
    %v262 = vsel %vm91, %v41, 0
    %v265 = vsel %vm91, %v42, 0
    %v268 = vsel %vm91, %v43, 0
    %v271 = vsel %vm91, %v44, 0
    %v274 = vsel %vm91, %v45, 0
    %v277 = vsel %vm91, %v46, 0
    %v280 = vsel %vm91, %v47, 0
    %v283 = vsel %vm91, %v48, 0
    %v286 = vsel %vm91, %v49, 0
    %v289 = vsel %vm91, %v50, 0
    %v292 = vsel %vm91, %v51, 0
    %v295 = vsel %vm91, %v52, 0
    %v298 = vsel %vm91, %v53, 0
    %v301 = vsel %vm91, %v54, 0
    %v304 = vsel %vm91, %v55, 0
    %v307 = vsel %vm91, %v56, 0
    %v310 = vsel %vm91, %v57, 0
    %v313 = vsel %vm91, %v58, 0
    %v316 = vsel %vm91, %v59, 0
    %v319 = vsel %vm91, %v60, 0
    %v322 = vsel %vm91, %v61, 0
    %v325 = vsel %vm91, %v62, 0
    %327 = vmatprep.subr.mxu0 0.0
    %328 = vmatpush1.xpose.msra.mxu0 %v298
    %329 = vmatprep.subr.mxu0 0.0
    %330 = vmatpush1.xpose.msra.mxu0 %v295
    %331 = vmatprep.subr.mxu0 0.0
    %332 = vmatpush1.xpose.msra.mxu0 %v292
    %333 = vmatprep.subr.mxu0 0.0
    %334 = vmatpush1.xpose.msra.mxu0 %v289
    %335 = vmatprep.subr.mxu0 0.0
    %336 = vmatpush1.xpose.msra.mxu0 %v286
    %337 = vmatprep.subr.mxu0 0.0
    %338 = vmatpush1.xpose.msra.mxu0 %v283
    %339 = vmatprep.subr.mxu0 0.0
    %340 = vmatpush1.xpose.msra.mxu0 %v280
    %341 = vmatprep.subr.mxu0 0.0
    %342 = vmatpush1.xpose.msra.mxu0 %v277
    %343 = vmatprep.subr.mxu0 0.0
    %344 = vmatpush1.xpose.msra.mxu0 %v274
    %345 = vmatprep.subr.mxu0 0.0
    %346 = vmatpush1.xpose.msra.mxu0 %v271
    %347 = vmatprep.subr.mxu0 0.0
    %348 = vmatpush1.xpose.msra.mxu0 %v268
    %349 = vmatprep.subr.mxu0 0.0
    %350 = vmatpush1.xpose.msra.mxu0 %v265
    %351 = vmatprep.subr.mxu0 0.0
    %352 = vmatpush1.xpose.msra.mxu0 %v262
    %353 = vmatprep.subr.mxu0 0.0
    %354 = vmatpush1.xpose.msra.mxu0 %v259
    %355 = vmatprep.subr.mxu0 0.0
    %356 = vmatpush1.xpose.msra.mxu0 %v256
    %357 = vmatprep.subr.mxu0 0.0
    %358 = vmatpush1.xpose.msra.mxu0 %v253
    %359 = vmatprep.subr.mxu0 0.0
    %360 = vmatpush2.xpose.msra.mxu0 0.0
    %361 = vmatprep.subr.mxu0 0.0
    %362 = vmatpush2.xpose.msra.mxu0 0.0
    %363 = vmatprep.subr.mxu0 0.0
    %364 = vmatpush2.xpose.msra.mxu0 0.0
    %365 = vmatprep.subr.mxu0 0.0
    %366 = vmatpush2.xpose.msra.mxu0 0.0
    %367 = vmatprep.subr.mxu0 0.0
    %368 = vmatpush2.xpose.msra.mxu0 0.0
    %369 = vmatprep.subr.mxu0 0.0
    %370 = vmatpush2.xpose.msra.mxu0 0.0
    %371 = vmatprep.subr.mxu0 0.0
    %372 = vmatpush2.xpose.msra.mxu0 0.0
    %373 = vmatprep.subr.mxu0 0.0
    %374 = vmatpush2.xpose.msra.mxu0 %v325
    %375 = vmatprep.subr.mxu0 0.0
    %376 = vmatpush2.xpose.msra.mxu0 %v322
    %377 = vmatprep.subr.mxu0 0.0
    %378 = vmatpush2.xpose.msra.mxu0 %v319
    %379 = vmatprep.subr.mxu0 0.0
    %380 = vmatpush2.xpose.msra.mxu0 %v316
    %381 = vmatprep.subr.mxu0 0.0
    %382 = vmatpush2.xpose.msra.mxu0 %v313
    %383 = vmatprep.subr.mxu0 0.0
    %384 = vmatpush2.xpose.msra.mxu0 %v310
    %385 = vmatprep.subr.mxu0 0.0
    %386 = vmatpush2.xpose.msra.mxu0 %v307
    %387 = vmatprep.subr.mxu0 0.0
    %388 = vmatpush2.xpose.msra.mxu0 %v304
    %389 = vmatprep.subr.mxu0 0.0
    %390 = vmatpush2.xpose.msra.mxu0 %v301
    %391 = vmatprep.mubr.f32.mxu0 0.0
    %392 = vmatmul.mubr.f32.gmra.mxu0 %v250
    %v393 = vpop.f32.mrf.mxu0
    %v394 = vadd.f32 %v244, %v393
    %v395 = vpop.f32.mrf.mxu0
    %v396 = vadd.f32 %v248, %v395
    %397 = vdwg.mxu0
    %399 = vset.pattern.permute.xlu0 0
    %400 = vperm.xlu0 %399, %v64
    %v401 = vpop.permute.xlu0 %400
    %v403 = vadd.f32 %v394, %v401
    %v404 = vadd.f32 %v396, %v401
    %v405 = vmin.f32 %v403, 0.0
    %v406 = vmin.f32 %v404, 0.0
    %v407 = vmul.f32 %v405, 1.442695
    %v408 = vpow.pop %v407
    %v409 = vmul.f32 %v406, 1.442695
    %v410 = vpow.pop %v409
    %s411 = sld [smem:[#allocation3]]
    %v412 = vstv %s411
    %v413 = vmul.f32 %v412, %v408
    %v414 = vmul.f32 %v412, %v410
    %s415 = sld [smem:[#allocation3 + $0x1]]
    %v416 = vstv %s415
    %v417 = vmul.f32 %v416, %v408
    %v418 = vmul.f32 %v416, %v410
    %v421 = vrot.slane %v417, 1
    %v422 = vrot.slane %v418, 1
    %v425 = vadd.f32 %v413, %v421
    %v426 = vadd.f32 %v414, %v422
    %s427 = sld [smem:[#allocation3 + $0x2]]
    %v428 = vstv %s427
    %v429 = vmul.f32 %v428, %v408
    %v430 = vmul.f32 %v428, %v410
    %v433 = vrot.slane %v429, 2
    %v434 = vrot.slane %v430, 2
    %v437 = vadd.f32 %v425, %v433
    %v438 = vadd.f32 %v426, %v434
    %s439 = sld [smem:[#allocation2]]
    %v440 = vstv %s439
    %v441 = vadd.f32 %v437, %v440
    %v442 = vadd.f32 %v438, %v440
    %v445 = vcombine.low %v441, %v442
    %v447 = vunpack.c.l.s4 1966171168
    %v448 = vunpack.c.0.s8 %v447
    %v449 = vlaneseq
    %v450 = vshrl.u32 %v449, 7
    %v451 = vsub.s32 %v448, %v450
    %v452 = vrot.slane %v445, %v451
    %v454 = vunpack.c.l.s4 1966171168
    %v455 = vunpack.c.0.s8 %v454
    %v456 = vlaneseq
    %v457 = vshrl.u32 %v456, 7
    %v458 = vsub.s32 %v455, %v457
    %v459 = vrot.slane %v452, %v458
    %v461 = vlaneseq
    %vm462 = vcmp.ge.s32.totalorder %v461, 0
    %vm463 = vcmp.lt.s32.totalorder %v461, 200
    %vm464 = vmand %vm462, %vm463
    %465 = vst.msk [vmem:[#allocation6] sm:$0x3] %vm464, %v459
    // Predicated region
    $region30: #{tpu_custom_call.1} parent=1 // pred_check
      _
    $region31: #{tpu_custom_call.1} parent=1 // pred_check_branch
      %467 = sbr.rel (0) target = $region33
    $region32: #{tpu_custom_call.1} parent=1 // pred_region
      %s469 = ssub.s32 32, 32
      %470 = vsyncadd [#allocation4], %s469
      %s472 = sshll.u32 [#allocation6], 4
      %s473 = int_to_ptr.vmem [resolvable:$true] %s472
      %475 = dma.vmem_to_hbm [thread:$0]  %s473, 32, %s6, [#allocation4]
    $region33: #{tpu_custom_call.1} parent=1 // pred_fallthru
      _
    // Predicated region
    $region34: #{tpu_custom_call.1} parent=1 // pred_check
      _
    $region35: #{tpu_custom_call.1} parent=1 // pred_check_branch
      %477 = sbr.rel (0) target = $region37
    $region36: #{tpu_custom_call.1} parent=1 // pred_region
      %478 = dma.done [#allocation4], 32
    $region37: #{tpu_custom_call.1} parent=1 // pred_fallthru
      _
    %479 = vsyncpa [#allocation4], 1
    %480 = vsyncpa [#allocation5], 1

</llo_original>
